<compile_context>
chip_gen: v5e
topology: v5e:2x2
jax: 0.10.0
libtpu: 0.0.40
codegen_flags: <defaults>
</compile_context>

<pallas_src>
import functools

import jax
import jax.numpy as jnp
from jax.experimental import pallas as pl
from jax.experimental.pallas import tpu as pltpu


# ----------------------------------------------------------------------------
# Generation-aware configuration
# ----------------------------------------------------------------------------
@functools.lru_cache(maxsize=None)
def _tpu_config():
    """Returns (block_budget_bytes, vmem_limit_bytes, multi_core, bf16_vpu)."""
    vmem_capacity = 64 * 1024 * 1024  # conservative default (v7x-sized)
    try:
        info = pltpu.get_tpu_info()
        vmem_capacity = int(getattr(info, "vmem_capacity_bytes", vmem_capacity))
    except Exception:
        pass

    multi_core = False   # v7x has 2 TensorCores/chip
    bf16_vpu = True      # v6e/v7x have native bf16 VALU; v5e (and older) do not
    try:
        kind = jax.devices()[0].device_kind.lower()
        if ("v5 lite" in kind) or ("v5e" in kind) or ("v5lite" in kind):
            bf16_vpu = False
        if ("v2" in kind) or ("v3" in kind) or ("v4" in kind):
            bf16_vpu = False
        if "v7" in kind:
            multi_core = True
    except Exception:
        pass

    if vmem_capacity >= 96 * 1024 * 1024:
        # v5e / v6e: 128 MiB physical VMEM -> large pipeline blocks keep the
        # single-read fused path viable for much larger C*HW rows.
        block_budget = 48 * 1024 * 1024
        vmem_limit = 100 * 1024 * 1024
    else:
        # v7x: 64 MiB physical -> stay conservative.
        block_budget = 16 * 1024 * 1024
        vmem_limit = 40 * 1024 * 1024
    return block_budget, vmem_limit, multi_core, bf16_vpu


# ----------------------------------------------------------------------------
# Kernels
# ----------------------------------------------------------------------------
def _fused_kernel(x_ref, w1t_ref, w2t_ref, o_ref, *, hw, native_scale):
    """x_ref: (Bt, C, HW); w1t_ref: (C, hidden); w2t_ref: (hidden, C); o_ref: (Bt, 2, C, HW)."""
    x = x_ref[...]                                               # (Bt, C, HW), input dtype

    # Global avg / max pool over the spatial axis (AdaptiveAvg/MaxPool2d(1)).
    # Pooled values go to f32 for the MLP; only the sum path needs a full-dtype
    # upcast of x (budgeted in _fused_batch_block).
    avg = jnp.sum(x.astype(jnp.float32), axis=2) * (1.0 / hw)    # (Bt, C)
    mx = jnp.max(x, axis=2).astype(jnp.float32)                  # (Bt, C)

    # Two 1x1 convs (no bias), both pooling branches share fc2:
    #   att = (relu(avg @ W1^T) + relu(max @ W1^T)) @ W2^T
    w1t = w1t_ref[...].astype(jnp.float32)                       # (C, hidden)
    w2t = w2t_ref[...].astype(jnp.float32)                       # (hidden, C)
    h = (jnp.maximum(jnp.dot(avg, w1t, preferred_element_type=jnp.float32), 0.0)
         + jnp.maximum(jnp.dot(mx, w1t, preferred_element_type=jnp.float32), 0.0))
    att = jnp.dot(h, w2t, preferred_element_type=jnp.float32)    # (Bt, C)

    s_pos = jax.nn.sigmoid(att)                                  # (Bt, C)
    s_neg = jax.nn.sigmoid(1.0 - att)                            # (Bt, C)

    if native_scale:
        # Scale in the input dtype (bf16 VALU on v6e/v7x; no full-block f32 temps).
        sp = s_pos.astype(x.dtype)[:, :, None]
        sn = s_neg.astype(x.dtype)[:, :, None]
        o_ref[:, 0, :, :] = x * sp
        o_ref[:, 1, :, :] = x * sn
    else:
        xf = x.astype(jnp.float32)
        o_ref[:, 0, :, :] = (xf * s_pos[:, :, None]).astype(o_ref.dtype)
        o_ref[:, 1, :, :] = (xf * s_neg[:, :, None]).astype(o_ref.dtype)


def _pool_kernel(x_ref, avg_ref, max_ref, *, hw, hwt):
    """Pass 1 of the two-pass path, accumulating over the hw grid axis.
    x_ref: (1, Ct, HWt); avg_ref/max_ref: (1, Ct) float32 (resident across hw axis)."""
    h = pl.program_id(2)
    x = x_ref[...].astype(jnp.float32)                           # (1, Ct, HWt)

    if hw % hwt != 0:
        # Mask the ragged last spatial tile (out-of-bounds lanes hold stale VMEM).
        col = jax.lax.broadcasted_iota(jnp.int32, x.shape, 2) + h * hwt
        valid = col < hw
        xs = jnp.where(valid, x, 0.0)
        xm = jnp.where(valid, x, -jnp.inf)
    else:
        xs, xm = x, x

    s = jnp.sum(xs, axis=2)                                      # (1, Ct)
    m = jnp.max(xm, axis=2)                                      # (1, Ct)

    @pl.when(h == 0)
    def _():
        avg_ref[...] = jnp.zeros_like(avg_ref)
        max_ref[...] = jnp.full(max_ref.shape, -jnp.inf, dtype=max_ref.dtype)

    avg_ref[...] += s
    max_ref[...] = jnp.maximum(max_ref[...], m)

    @pl.when(h == pl.num_programs(2) - 1)
    def _():
        avg_ref[...] = avg_ref[...] * (1.0 / hw)


def _scale_kernel(x_ref, spos_ref, sneg_ref, o_ref, *, native_scale):
    """Pass 2 of the two-pass path. x_ref: (1, Ct, HWt); spos/sneg: (1, Ct) f32;
    o_ref: (1, 2, Ct, HWt)."""
    x = x_ref[...]
    sp = spos_ref[...][:, :, None]                               # (1, Ct, 1) f32
    sn = sneg_ref[...][:, :, None]
    if native_scale:
        o_ref[:, 0, :, :] = x * sp.astype(x.dtype)
        o_ref[:, 1, :, :] = x * sn.astype(x.dtype)
    else:
        xf = x.astype(jnp.float32)
        o_ref[:, 0, :, :] = (xf * sp).astype(o_ref.dtype)
        o_ref[:, 1, :, :] = (xf * sn).astype(o_ref.dtype)


# ----------------------------------------------------------------------------
# Block-size selection
# ----------------------------------------------------------------------------
def _fused_batch_block(B, C, HW, itemsize, scale_itemsize, block_budget, multi_core):
    """Largest divisor of B whose (double-buffered pipeline blocks + in-kernel
    temporaries) fit the VMEM budget. Returns 0 if even one row does not fit."""
    row = C * HW
    pipeline = 2 * 3 * row * itemsize              # double-buffered x block + 2C-wide out block
    temps = row * 4 + 2 * row * scale_itemsize     # f32 pooling upcast + two scaling products
    per_row = pipeline + temps
    cap = block_budget // per_row
    if cap < 1:
        return 0
    cap = min(cap, B)
    if multi_core and B >= 2:
        cap = min(cap, pl.cdiv(B, 2))              # keep >= 2 grid steps for 2 TCs (v7x only)
    for bt in range(cap, 0, -1):
        if B % bt == 0:
            return bt
    return 1


def _two_pass_tiles(C, HW, itemsize, block_budget):
    """(channel tile, spatial tile) for the two-pass path. Channel tile is a
    dtype-aware sublane multiple (or full C); spatial tile a multiple of 128 (or HW)."""
    sub = max(8, 32 // max(itemsize, 1))           # 8 for f32, 16 for bf16, 32 for int8
    per_elem = 6 * itemsize + 12                   # double-buffered in+out blocks + f32 temps
    max_elems = max(block_budget // per_elem, sub * 128)
    if sub * HW <= max_elems:
        hwt = HW
        ct = (max_elems // HW) // sub * sub
        ct = C if ct >= C else max(ct, sub)
    else:
        ct = sub
        hwt = min(HW, max(((max_elems // sub) // 128) * 128, 128))
    return ct, hwt


# ----------------------------------------------------------------------------
# Wrappers
# ----------------------------------------------------------------------------
def _channel_attention_fused(x_flat, w1, w2, bt, vmem_limit, native_scale):
    B, C, HW = x_flat.shape
    hidden = w1.shape[0]
    kernel = functools.partial(_fused_kernel, hw=HW, native_scale=native_scale)
    return pl.pallas_call(
        kernel,
        out_shape=jax.ShapeDtypeStruct((B, 2, C, HW), x_flat.dtype),
        grid=(B // bt,),
        in_specs=[
            pl.BlockSpec((bt, C, HW), lambda b: (b, 0, 0)),
            pl.BlockSpec((C, hidden), lambda b: (0, 0)),   # resident across grid
            pl.BlockSpec((hidden, C), lambda b: (0, 0)),   # resident across grid
        ],
        out_specs=pl.BlockSpec((bt, 2, C, HW), lambda b: (b, 0, 0, 0)),
        compiler_params=pltpu.CompilerParams(
            dimension_semantics=("parallel",),
            vmem_limit_bytes=vmem_limit,
        ),
    )(x_flat, w1.T, w2.T)


def _channel_attention_two_pass(x_flat, w1, w2, ct, hwt, vmem_limit, native_scale):
    B, C, HW = x_flat.shape
    cg = pl.cdiv(C, ct)
    hg = pl.cdiv(HW, hwt)

    # Pass 1: avg + max pool in a single read of x; hw axis is the reduction axis
    # (last in grid, 'arbitrary'), output blocks stay resident as accumulators.
    avg, mx = pl.pallas_call(
        functools.partial(_pool_kernel, hw=HW, hwt=hwt),
        out_shape=(
            jax.ShapeDtypeStruct((B, C), jnp.float32),
            jax.ShapeDtypeStruct((B, C), jnp.float32),
        ),
        grid=(B, cg, hg),
        in_specs=[pl.BlockSpec((1, ct, hwt), lambda b, c, h: (b, c, h))],
        out_specs=(
            pl.BlockSpec((1, ct), lambda b, c, h: (b, c)),
            pl.BlockSpec((1, ct), lambda b, c, h: (b, c)),
        ),
        compiler_params=pltpu.CompilerParams(
            dimension_semantics=("parallel", "parallel", "arbitrary"),
            vmem_limit_bytes=vmem_limit,
        ),
    )(x_flat)

    # Tiny MLP + sigmoids on (B, C): noise vs. HBM traffic -> plain XLA.
    h = jnp.maximum(avg @ w1.T, 0.0) + jnp.maximum(mx @ w1.T, 0.0)
    att = h @ w2.T
    s_pos = jax.nn.sigmoid(att).astype(jnp.float32)              # (B, C)
    s_neg = jax.nn.sigmoid(1.0 - att).astype(jnp.float32)        # (B, C)

    # Pass 2: pure elementwise scale, tiled over (B, C, HW).
    return pl.pallas_call(
        functools.partial(_scale_kernel, native_scale=native_scale),
        out_shape=jax.ShapeDtypeStruct((B, 2, C, HW), x_flat.dtype),
        grid=(B, cg, hg),
        in_specs=[
            pl.BlockSpec((1, ct, hwt), lambda b, c, h: (b, c, h)),
            pl.BlockSpec((1, ct), lambda b, c, h: (b, c)),
            pl.BlockSpec((1, ct), lambda b, c, h: (b, c)),
        ],
        out_specs=pl.BlockSpec((1, 2, ct, hwt), lambda b, c, h: (b, 0, c, h)),
        compiler_params=pltpu.CompilerParams(
            dimension_semantics=("parallel", "parallel", "parallel"),
            vmem_limit_bytes=vmem_limit,
        ),
    )(x_flat, s_pos, s_neg)


def channel_attention(x, w1, w2, *, force_two_pass=False):
    """x: (B, C, H, W). w1 = fc1.weight[:, :, 0, 0] (C//16, C);
    w2 = fc2.weight[:, :, 0, 0] (C, C//16). Returns (B, 2C, H, W)."""
    B, C, H, W = x.shape
    HW = H * W
    hidden = w1.shape[0]
    assert w1.shape == (hidden, C) and w2.shape == (C, hidden)

    x_flat = x.reshape(B, C, HW)
    itemsize = x.dtype.itemsize

    block_budget, vmem_limit, multi_core, bf16_vpu = _tpu_config()
    # Scale in the input dtype where the VALU supports it (f32 always; bf16 on v6e/v7x).
    native_scale = (x.dtype == jnp.float32) or bf16_vpu
    scale_itemsize = itemsize if native_scale else 4

    bt = _fused_batch_block(B, C, HW, itemsize, scale_itemsize, block_budget, multi_core)
    if bt >= 1 and not force_two_pass:
        out = _channel_attention_fused(x_flat, w1, w2, bt, vmem_limit, native_scale)
    else:
        ct, hwt = _two_pass_tiles(C, HW, itemsize, block_budget)
        out = _channel_attention_two_pass(x_flat, w1, w2, ct, hwt, vmem_limit, native_scale)

    # (B, 2, C, HW) -> (B, 2C, H, W) is a contiguous (free) reshape.
    return out.reshape(B, 2 * C, H, W)


def channel_attention_ref(x, w1, w2):
    """Pure-JAX reference mirroring the PyTorch forward."""
    avg = jnp.mean(x, axis=(2, 3))                       # (B, C)
    mx = jnp.max(x, axis=(2, 3))                         # (B, C)
    h = jnp.maximum(avg @ w1.T, 0.0) + jnp.maximum(mx @ w1.T, 0.0)
    out = (h @ w2.T)[:, :, None, None]                   # (B, C, 1, 1)
    return jnp.concatenate(
        [x * jax.nn.sigmoid(out), x * jax.nn.sigmoid(1.0 - out)], axis=1
    )


if __name__ == "__main__":
    # in_planes must be divisible by 16 (fc1 reduces by ratio 16).
    B, C, H, W = 2, 32, 16, 16
    hidden = C // 16

    key = jax.random.PRNGKey(0)
    kx, k1, k2 = jax.random.split(key, 3)
    x = jax.random.normal(kx, (B, C, H, W), dtype=jnp.float32)
    # Deterministic synthetic weights for the two 1x1 convs (bias=False).
    w1 = 0.1 * jax.random.normal(k1, (hidden, C), dtype=jnp.float32)
    w2 = 0.1 * jax.random.normal(k2, (C, hidden), dtype=jnp.float32)

    ref = channel_attention_ref(x, w1, w2)

    out_fused = jax.block_until_ready(channel_attention(x, w1, w2))
    assert out_fused.shape == (B, 2 * C, H, W)
    assert jnp.allclose(out_fused, ref, atol=1e-5, rtol=1e-5), "fused path mismatch"

    # Also exercise the large-C*HW two-pass path on the small shape.
    out_2p = jax.block_until_ready(channel_attention(x, w1, w2, force_two_pass=True))
    assert jnp.allclose(out_2p, ref, atol=1e-5, rtol=1e-5), "two-pass path mismatch"

    print("KERNEL_OK")
</pallas_src>

<mosaic_0001>
module attributes {stable_mosaic.version = 11 : i64} {
  func.func @_fused_kernel(%arg0: i32, %arg1: memref<2x32x256xf32, #tpu.memory_space<vmem>>, %arg2: memref<32x2xf32, #tpu.memory_space<vmem>>, %arg3: memref<2x32xf32, #tpu.memory_space<vmem>>, %arg4: memref<2x2x32x256xf32, #tpu.memory_space<vmem>>) attributes {dimension_semantics = [#tpu.dimension_semantics<parallel>], iteration_bounds = array<i64: 1>, scalar_prefetch = 0 : i64, scratch_operands = 0 : i64, tpu.core_type = #tpu.core_type<tc>, window_params = [{transform_indices = @transform_0, window_bounds = array<i64: 2, 32, 256>}, {pipeline_mode = #tpu.pipeline_mode<synchronous>, transform_indices = @transform_1, window_bounds = array<i64: 32, 2>}, {pipeline_mode = #tpu.pipeline_mode<synchronous>, transform_indices = @transform_2, window_bounds = array<i64: 2, 32>}, {transform_indices = @transform_3, window_bounds = array<i64: 2, 2, 32, 256>}]} {
    %c0 = arith.constant 0 : index
    %c0_0 = arith.constant 0 : index
    %c0_1 = arith.constant 0 : index
    %0 = vector.load %arg1[%c0, %c0_0, %c0_1] : memref<2x32x256xf32, #tpu.memory_space<vmem>>, vector<2x32x256xf32>
    %cst = arith.constant dense<0.000000e+00> : vector<2x32xf32>
    %1 = vector.multi_reduction <add>, %0, %cst [2] : vector<2x32x256xf32> to vector<2x32xf32>
    %cst_2 = arith.constant 3.906250e-03 : f32
    %2 = vector.broadcast %cst_2 : f32 to vector<2x32xf32>
    %3 = arith.mulf %1, %2 : vector<2x32xf32>
    %cst_3 = arith.constant dense<0xFF800000> : vector<2x32xf32>
    %4 = vector.multi_reduction <maximumf>, %0, %cst_3 [2] : vector<2x32x256xf32> to vector<2x32xf32>
    %c0_4 = arith.constant 0 : index
    %c0_5 = arith.constant 0 : index
    %5 = vector.load %arg2[%c0_4, %c0_5] : memref<32x2xf32, #tpu.memory_space<vmem>>, vector<32x2xf32>
    %c0_6 = arith.constant 0 : index
    %c0_7 = arith.constant 0 : index
    %6 = vector.load %arg3[%c0_6, %c0_7] : memref<2x32xf32, #tpu.memory_space<vmem>>, vector<2x32xf32>
    %cst_8 = arith.constant dense<0.000000e+00> : vector<2x2xf32>
    %7 = tpu.matmul %3, %5, %cst_8 {dimension_numbers = #tpu.dot_dimension_numbers<[1], [0], [0], [1], [0, 0, 1, 1], [], []>} : vector<2x32xf32>, vector<32x2xf32>, vector<2x2xf32> -> vector<2x2xf32>
    %cst_9 = arith.constant 0.000000e+00 : f32
    %8 = vector.broadcast %cst_9 : f32 to vector<2x2xf32>
    %9 = arith.maximumf %7, %8 : vector<2x2xf32>
    %cst_10 = arith.constant dense<0.000000e+00> : vector<2x2xf32>
    %10 = tpu.matmul %4, %5, %cst_10 {dimension_numbers = #tpu.dot_dimension_numbers<[1], [0], [0], [1], [0, 0, 1, 1], [], []>} : vector<2x32xf32>, vector<32x2xf32>, vector<2x2xf32> -> vector<2x2xf32>
    %cst_11 = arith.constant 0.000000e+00 : f32
    %11 = vector.broadcast %cst_11 : f32 to vector<2x2xf32>
    %12 = arith.maximumf %10, %11 : vector<2x2xf32>
    %13 = arith.addf %9, %12 : vector<2x2xf32>
    %cst_12 = arith.constant dense<0.000000e+00> : vector<2x32xf32>
    %14 = tpu.matmul %13, %6, %cst_12 {dimension_numbers = #tpu.dot_dimension_numbers<[1], [0], [0], [1], [0, 0, 1, 1], [], []>} : vector<2x2xf32>, vector<2x32xf32>, vector<2x32xf32> -> vector<2x32xf32>
    %15 = arith.negf %14 : vector<2x32xf32>
    %16 = math.exp %15 : vector<2x32xf32>
    %cst_13 = arith.constant 1.000000e+00 : f32
    %17 = vector.broadcast %cst_13 : f32 to vector<2x32xf32>
    %18 = arith.addf %17, %16 : vector<2x32xf32>
    %19 = arith.divf %17, %18 : vector<2x32xf32>
    %cst_14 = arith.constant 1.000000e+00 : f32
    %20 = vector.broadcast %cst_14 : f32 to vector<2x32xf32>
    %21 = arith.subf %20, %14 : vector<2x32xf32>
    %22 = arith.negf %21 : vector<2x32xf32>
    %23 = math.exp %22 : vector<2x32xf32>
    %cst_15 = arith.constant 1.000000e+00 : f32
    %24 = vector.broadcast %cst_15 : f32 to vector<2x32xf32>
    %25 = arith.addf %24, %23 : vector<2x32xf32>
    %26 = arith.divf %24, %25 : vector<2x32xf32>
    %27 = vector.shape_cast %19 : vector<2x32xf32> to vector<2x32x1xf32>
    %28 = vector.shape_cast %26 : vector<2x32xf32> to vector<2x32x1xf32>
    %29 = vector.broadcast %27 : vector<2x32x1xf32> to vector<2x32x256xf32>
    %30 = arith.mulf %0, %29 : vector<2x32x256xf32>
    %c0_16 = arith.constant 0 : index
    %c0_17 = arith.constant 0 : index
    %c0_18 = arith.constant 0 : index
    %c0_19 = arith.constant 0 : index
    %31 = vector.load %arg4[%c0_16, %c0_17, %c0_18, %c0_19] : memref<2x2x32x256xf32, #tpu.memory_space<vmem>>, vector<2x1x32x256xf32>
    %32 = vector.shape_cast %31 : vector<2x1x32x256xf32> to vector<2x32x256xf32>
    %33 = vector.shape_cast %30 : vector<2x32x256xf32> to vector<2x1x32x256xf32>
    tpu.vector_store %arg4[%c0_16, %c0_17, %c0_18, %c0_19], %33 {strides = array<i32>} : memref<2x2x32x256xf32, #tpu.memory_space<vmem>>, vector<2x1x32x256xf32>,
    %34 = vector.broadcast %28 : vector<2x32x1xf32> to vector<2x32x256xf32>
    %35 = arith.mulf %0, %34 : vector<2x32x256xf32>
    %c0_20 = arith.constant 0 : index
    %c1 = arith.constant 1 : index
    %c0_21 = arith.constant 0 : index
    %c0_22 = arith.constant 0 : index
    %36 = vector.load %arg4[%c0_20, %c1, %c0_21, %c0_22] : memref<2x2x32x256xf32, #tpu.memory_space<vmem>>, vector<2x1x32x256xf32>
    %37 = vector.shape_cast %36 : vector<2x1x32x256xf32> to vector<2x32x256xf32>
    %38 = vector.shape_cast %35 : vector<2x32x256xf32> to vector<2x1x32x256xf32>
    tpu.vector_store %arg4[%c0_20, %c1, %c0_21, %c0_22], %38 {strides = array<i32>} : memref<2x2x32x256xf32, #tpu.memory_space<vmem>>, vector<2x1x32x256xf32>,
    return
  }
  func.func @transform_0(%arg0: i32) -> (i32, i32, i32) {
    %c0_i32 = arith.constant 0 : i32
    %c0_i32_0 = arith.constant 0 : i32
    %c0_i32_1 = arith.constant 0 : i32
    return %arg0, %c0_i32, %c0_i32_0 : i32, i32, i32
  }
  func.func @transform_1(%arg0: i32) -> (i32, i32) {
    %c0_i32 = arith.constant 0 : i32
    %c0_i32_0 = arith.constant 0 : i32
    %c0_i32_1 = arith.constant 0 : i32
    return %c0_i32, %c0_i32_0 : i32, i32
  }
  func.func @transform_2(%arg0: i32) -> (i32, i32) {
    %c0_i32 = arith.constant 0 : i32
    %c0_i32_0 = arith.constant 0 : i32
    %c0_i32_1 = arith.constant 0 : i32
    return %c0_i32, %c0_i32_0 : i32, i32
  }
  func.func @transform_3(%arg0: i32) -> (i32, i32, i32, i32) {
    %c0_i32 = arith.constant 0 : i32
    %c0_i32_0 = arith.constant 0 : i32
    %c0_i32_1 = arith.constant 0 : i32
    %c0_i32_2 = arith.constant 0 : i32
    return %arg0, %c0_i32, %c0_i32_0, %c0_i32_1 : i32, i32, i32, i32
  }
}

</mosaic_0001>

<llo_original>
// kernel: tpu_custom_call.1
$region0: #{tpu_custom_call.1}
  #allocation0 [shape = 'u32[]', space=smem, size = 0x4, offset = 0x4, fixed_abs, tag = 'smem constant byte address 0x4 - core index']
  #allocation1 [shape = 'u32[72,128]{1,0:T(1,128)}', space=vmem, size = 0x9000, scoped, tag = 'internal scratch']
  %s0 = inlined_call_operand.hbm [shape: f32[2,32,256], index: 0, kind: input, shape index: {}]
  %s1 = inlined_call_operand.vmem [shape: f32[32,2], index: 1, kind: input, shape index: {}]
  %s2 = inlined_call_operand.vmem [shape: f32[2,32], index: 2, kind: input, shape index: {}]
  %s3 = inlined_call_operand.hbm [shape: f32[2,2,32,256], index: 3, kind: output, shape index: {}]
  %s4 = sld [smem:[#allocation0]]
  $region26: #{tpu_custom_call.1} parent=0
    _
  %s6 = ssub.s32 1, %s4
  %s7 = scalar_select 0, %s6, %s4
  $region1: #{tpu_custom_call.1} parent=0
    #allocation2 [shape = 'u8[65536]{0}', space=vmem, size = 0x10000, scoped, tag = 'input window, operand 0, single buffered']
    #allocation3 [shape = 's32[1]{0}', space=sflag, size = 0x4, scoped, tag = 'scoped memory for tpu_custom_call.1']
    #allocation4 [shape = 's32[1]{0}', space=sflag, size = 0x4, scoped, tag = 'scoped memory for tpu_custom_call.1']
    #allocation5 [shape = 'u8[131072]{0}', space=vmem, size = 0x20000, scoped, tag = 'output window, operand 0, single buffered']
    %8 = vsyncpa [#allocation3], 0
    %9 = vsyncpa [#allocation4], 0
    // Predicated region
    $region2: #{tpu_custom_call.1} parent=1 // pred_check
      _
    $region3: #{tpu_custom_call.1} parent=1 // pred_check_branch
      %11 = sbr.rel (0) target = $region5
    $region4: #{tpu_custom_call.1} parent=1 // pred_region
      %13 = vsyncadd [#allocation3], 0
      %s14 = sshll.u32 %s0, 4
      %s15 = int_to_ptr.hbm [resolvable:$true] %s14
      %s16 = sshll.u32 [#allocation2], 4
      %s17 = int_to_ptr.vmem [resolvable:$true] %s16
      %22 = dma.hbm_to_vmem [thread:$0]  %s15, 2048, %s17, [#allocation3], 256, 256, 16
    $region5: #{tpu_custom_call.1} parent=1 // pred_fallthru
      _
    // Predicated region
    $region6: #{tpu_custom_call.1} parent=1 // pred_check
      _
    $region7: #{tpu_custom_call.1} parent=1 // pred_check_branch
      %24 = sbr.rel (0) target = $region9
    $region8: #{tpu_custom_call.1} parent=1 // pred_region
      _
    $region9: #{tpu_custom_call.1} parent=1 // pred_fallthru
      _
    // Predicated region
    $region10: #{tpu_custom_call.1} parent=1 // pred_check
      _
    $region11: #{tpu_custom_call.1} parent=1 // pred_check_branch
      %26 = sbr.rel (0) target = $region13
    $region12: #{tpu_custom_call.1} parent=1 // pred_region
      _
    $region13: #{tpu_custom_call.1} parent=1 // pred_fallthru
      _
    // Predicated region
    $region14: #{tpu_custom_call.1} parent=1 // pred_check
      _
    $region15: #{tpu_custom_call.1} parent=1 // pred_check_branch
      %28 = sbr.rel (0) target = $region17
    $region16: #{tpu_custom_call.1} parent=1 // pred_region
      %30 = dma.done [#allocation3], 2048
    $region17: #{tpu_custom_call.1} parent=1 // pred_fallthru
      _
    %v31 = vld [vmem:[#allocation2] sm:$0xff]
    %v32 = vld [vmem:[#allocation2 + $0x8] sm:$0xff]
    %v33 = vld [vmem:[#allocation2 + $0x10] sm:$0xff]
    %v34 = vld [vmem:[#allocation2 + $0x18] sm:$0xff]
    %v35 = vld [vmem:[#allocation2 + $0x20] sm:$0xff]
    %v36 = vld [vmem:[#allocation2 + $0x28] sm:$0xff]
    %v37 = vld [vmem:[#allocation2 + $0x30] sm:$0xff]
    %v38 = vld [vmem:[#allocation2 + $0x38] sm:$0xff]
    %v39 = vld [vmem:[#allocation2 + $0x40] sm:$0xff]
    %v40 = vld [vmem:[#allocation2 + $0x48] sm:$0xff]
    %v41 = vld [vmem:[#allocation2 + $0x50] sm:$0xff]
    %v42 = vld [vmem:[#allocation2 + $0x58] sm:$0xff]
    %v43 = vld [vmem:[#allocation2 + $0x60] sm:$0xff]
    %v44 = vld [vmem:[#allocation2 + $0x68] sm:$0xff]
    %v45 = vld [vmem:[#allocation2 + $0x70] sm:$0xff]
    %v46 = vld [vmem:[#allocation2 + $0x78] sm:$0xff]
    %v47 = vadd.f32 %v31, %v32
    %48 = vadd.xlane.f32.xlu0 %v47
    %v49 = vpop.xlane.xlu0 %48
    %v50 = vadd.f32 %v33, %v34
    %51 = vadd.xlane.f32.xlu0 %v50
    %v52 = vpop.xlane.xlu0 %51
    %v53 = vadd.f32 %v35, %v36
    %54 = vadd.xlane.f32.xlu0 %v53
    %v55 = vpop.xlane.xlu0 %54
    %v56 = vadd.f32 %v37, %v38
    %57 = vadd.xlane.f32.xlu0 %v56
    %v58 = vpop.xlane.xlu0 %57
    %v59 = vadd.f32 %v39, %v40
    %60 = vadd.xlane.f32.xlu0 %v59
    %v61 = vpop.xlane.xlu0 %60
    %v62 = vadd.f32 %v41, %v42
    %63 = vadd.xlane.f32.xlu0 %v62
    %v64 = vpop.xlane.xlu0 %63
    %v65 = vadd.f32 %v43, %v44
    %66 = vadd.xlane.f32.xlu0 %v65
    %v67 = vpop.xlane.xlu0 %66
    %v68 = vadd.f32 %v45, %v46
    %69 = vadd.xlane.f32.xlu0 %v68
    %v70 = vpop.xlane.xlu0 %69
    %v71 = vmul.f32 %v49, 0.00390625
    %v72 = vmul.f32 %v52, 0.00390625
    %v73 = vmul.f32 %v55, 0.00390625
    %v74 = vmul.f32 %v58, 0.00390625
    %v75 = vmul.f32 %v61, 0.00390625
    %v76 = vmul.f32 %v64, 0.00390625
    %v77 = vmul.f32 %v67, 0.00390625
    %v78 = vmul.f32 %v70, 0.00390625
    %v79 = vmax.f32 %v31, %v32
    %80 = vmax.xlane.f32.xlu0 %v79
    %v81 = vpop.xlane.xlu0 %80
    %v82 = vmax.f32 %v33, %v34
    %83 = vmax.xlane.f32.xlu0 %v82
    %v84 = vpop.xlane.xlu0 %83
    %v85 = vmax.f32 %v35, %v36
    %86 = vmax.xlane.f32.xlu0 %v85
    %v87 = vpop.xlane.xlu0 %86
    %v88 = vmax.f32 %v37, %v38
    %89 = vmax.xlane.f32.xlu0 %v88
    %v90 = vpop.xlane.xlu0 %89
    %v91 = vmax.f32 %v39, %v40
    %92 = vmax.xlane.f32.xlu0 %v91
    %v93 = vpop.xlane.xlu0 %92
    %v94 = vmax.f32 %v41, %v42
    %95 = vmax.xlane.f32.xlu0 %v94
    %v96 = vpop.xlane.xlu0 %95
    %v97 = vmax.f32 %v43, %v44
    %98 = vmax.xlane.f32.xlu0 %v97
    %v99 = vpop.xlane.xlu0 %98
    %v100 = vmax.f32 %v45, %v46
    %101 = vmax.xlane.f32.xlu0 %v100
    %v102 = vpop.xlane.xlu0 %101
    %v103 = vld [vmem:[%s1] sm:$0xff]
    %v104 = vld [vmem:[%s1 + $0x8] sm:$0xff]
    %v105 = vld [vmem:[%s1 + $0x10] sm:$0xff]
    %v106 = vld [vmem:[%s1 + $0x18] sm:$0xff]
    %v107 = vld [vmem:[%s2] sm:$0x3]
    %v116 = vlaneseq
    %v117 = vand.u32 %v116, 127
    %v118 = vperm.slane %v71, %v117
    %v119 = vadd.s32 %v117, 4294967288
    %v120 = vperm.slane %v72, %v119
    %vm121 = vcmask 130112
    %v122 = vsel %vm121, %v120, %v118
    %v123 = vadd.s32 %v117, 4294967280
    %v124 = vperm.slane %v73, %v123
    %vm125 = vcmask 195712
    %v126 = vsel %vm125, %v124, %v122
    %v127 = vadd.s32 %v117, 4294967272
    %v128 = vperm.slane %v74, %v127
    %vm129 = vcmask 261312
    %v130 = vsel %vm129, %v128, %v126
    %v131 = vperm.slane %v75, %v117
    %v132 = vperm.slane %v76, %v119
    %v133 = vsel %vm121, %v132, %v131
    %v134 = vperm.slane %v77, %v123
    %v135 = vsel %vm125, %v134, %v133
    %v136 = vperm.slane %v78, %v127
    %v137 = vsel %vm129, %v136, %v135
    %vm138 = vcmask 1041409
    %v139 = vsel %vm138, %v137, %v130
    %vm140 = vcmask 261120
    %v141 = vsel %vm140, %v139, 0
    %143 = vmatpush.msra.mxu0 0.0
    %144 = vmatpush.msra.mxu0 0.0
    %145 = vmatpush.msra.mxu0 0.0
    %146 = vmatpush.msra.mxu0 0.0
    %147 = vmatpush.msra.mxu0 0.0
    %148 = vmatpush.msra.mxu0 0.0
    %149 = vmatpush.msra.mxu0 0.0
    %150 = vmatpush.msra.mxu0 0.0
    %151 = vmatpush.msra.mxu0 0.0
    %152 = vmatpush.msra.mxu0 0.0
    %153 = vmatpush.msra.mxu0 0.0
    %154 = vmatpush.msra.mxu0 0.0
    %155 = vmatpush.msra.mxu0 %v106
    %156 = vmatpush.msra.mxu0 %v105
    %157 = vmatpush.msra.mxu0 %v104
    %158 = vmatpush.msra.mxu0 %v103
    %159 = vmatmul.f32.gmra.mxu0 %v141
    %v160 = vpop.f32.mrf.mxu0
    %v161 = vadd.f32 0.0, %v160
    %162 = vdwg.mxu0
    %v163 = vmax.f32 %v161, 0.0
    %v172 = vperm.slane %v81, %v117
    %v173 = vperm.slane %v84, %v119
    %v174 = vsel %vm121, %v173, %v172
    %v175 = vperm.slane %v87, %v123
    %v176 = vsel %vm125, %v175, %v174
    %v177 = vperm.slane %v90, %v127
    %v178 = vsel %vm129, %v177, %v176
    %v179 = vperm.slane %v93, %v117
    %v180 = vperm.slane %v96, %v119
    %v181 = vsel %vm121, %v180, %v179
    %v182 = vperm.slane %v99, %v123
    %v183 = vsel %vm125, %v182, %v181
    %v184 = vperm.slane %v102, %v127
    %v185 = vsel %vm129, %v184, %v183
    %v186 = vsel %vm138, %v185, %v178
    %v187 = vsel %vm140, %v186, 0
    %189 = vmatpush.msra.mxu0 0.0
    %190 = vmatpush.msra.mxu0 0.0
    %191 = vmatpush.msra.mxu0 0.0
    %192 = vmatpush.msra.mxu0 0.0
    %193 = vmatpush.msra.mxu0 0.0
    %194 = vmatpush.msra.mxu0 0.0
    %195 = vmatpush.msra.mxu0 0.0
    %196 = vmatpush.msra.mxu0 0.0
    %197 = vmatpush.msra.mxu0 0.0
    %198 = vmatpush.msra.mxu0 0.0
    %199 = vmatpush.msra.mxu0 0.0
    %200 = vmatpush.msra.mxu0 0.0
    %201 = vmatpush.msra.mxu0 %v106
    %202 = vmatpush.msra.mxu0 %v105
    %203 = vmatpush.msra.mxu0 %v104
    %204 = vmatpush.msra.mxu0 %v103
    %205 = vmatmul.f32.gmra.mxu0 %v187
    %v206 = vpop.f32.mrf.mxu0
    %v207 = vadd.f32 0.0, %v206
    %208 = vdwg.mxu0
    %v209 = vmax.f32 %v207, 0.0
    %v210 = vadd.f32 %v163, %v209
    %vm211 = vcmask 15360
    %v213 = vsel %vm211, %v210, 0
    %vm215 = vcmask 1041408
    %v217 = vsel %vm215, %v107, 0
    %219 = vmatpush.msra.mxu0 0.0
    %220 = vmatpush.msra.mxu0 0.0
    %221 = vmatpush.msra.mxu0 0.0
    %222 = vmatpush.msra.mxu0 0.0
    %223 = vmatpush.msra.mxu0 0.0
    %224 = vmatpush.msra.mxu0 0.0
    %225 = vmatpush.msra.mxu0 0.0
    %226 = vmatpush.msra.mxu0 0.0
    %227 = vmatpush.msra.mxu0 0.0
    %228 = vmatpush.msra.mxu0 0.0
    %229 = vmatpush.msra.mxu0 0.0
    %230 = vmatpush.msra.mxu0 0.0
    %231 = vmatpush.msra.mxu0 0.0
    %232 = vmatpush.msra.mxu0 0.0
    %233 = vmatpush.msra.mxu0 0.0
    %234 = vmatpush.msra.mxu0 %v217
    %235 = vmatmul.f32.gmra.mxu0 %v213
    %v236 = vpop.f32.mrf.mxu0
    %v237 = vadd.f32 0.0, %v236
    %238 = vdwg.mxu0
    %v239 = vxor.u32 %v237, 2147483648
    %v240 = vmul.f32 %v239, 1.442695
    %v241 = vpow.pop %v240
    %v242 = vadd.f32 %v241, 1.0
    %v243 = vrcp.pop %v242
    %v244 = vmul.f32 %v242, %v243
    %v245 = vsub.f32 1.0, %v244
    %v246 = vmul.f32 %v243, %v245
    %v247 = vadd.f32 %v243, %v246
    %vm248 = vweird.f32 %v242
    %vm249 = vweird.f32 %v243
    %vm250 = vmor %vm248, %vm249
    %v251 = vsel %vm250, %v243, %v247
    %v252 = vand.u32 2147483647, %v242
    %vm253 = vcmp.eq.f32.partialorder %v252, 8.507059e+37
    %v254 = vand.u32 %v242, 2147483648
    %v255 = vor.u32 1.1754944e-38, %v254
    %v256 = vsel %vm253, %v255, %v251
    %v257 = vmul.f32 1.0, %v256
    %v258 = vsub.f32 1.0, %v237
    %v259 = vxor.u32 %v258, 2147483648
    %v260 = vmul.f32 %v259, 1.442695
    %v261 = vpow.pop %v260
    %v262 = vadd.f32 %v261, 1.0
    %v263 = vrcp.pop %v262
    %v264 = vmul.f32 %v262, %v263
    %v265 = vsub.f32 1.0, %v264
    %v266 = vmul.f32 %v263, %v265
    %v267 = vadd.f32 %v263, %v266
    %vm268 = vweird.f32 %v262
    %vm269 = vweird.f32 %v263
    %vm270 = vmor %vm268, %vm269
    %v271 = vsel %vm270, %v263, %v267
    %v272 = vand.u32 2147483647, %v262
    %vm273 = vcmp.eq.f32.partialorder %v272, 8.507059e+37
    %v274 = vand.u32 %v262, 2147483648
    %v275 = vor.u32 1.1754944e-38, %v274
    %v276 = vsel %vm273, %v275, %v271
    %v277 = vmul.f32 1.0, %v276
    %v278 = vperm.slane %v257, 0
    %v279 = vlaneseq
    %v280 = vshrl.u32 %v279, 7
    %282 = vset.pattern.permute.xlu0 %v280
    %283 = vperm.xlu0 %282, %v278
    %v284 = vpop.permute.xlu0 %283
    %v285 = vlaneseq
    %v286 = vshrl.u32 %v285, 7
    %v287 = vadd.s32 %v286, 8
    %288 = vset.pattern.permute.xlu0 %v287
    %289 = vperm.xlu0 %288, %v278
    %v290 = vpop.permute.xlu0 %289
    %v291 = vlaneseq
    %v292 = vshrl.u32 %v291, 7
    %v293 = vadd.s32 %v292, 16
    %294 = vset.pattern.permute.xlu0 %v293
    %295 = vperm.xlu0 %294, %v278
    %v296 = vpop.permute.xlu0 %295
    %v297 = vlaneseq
    %v298 = vshrl.u32 %v297, 7
    %v299 = vadd.s32 %v298, 24
    %300 = vset.pattern.permute.xlu0 %v299
    %301 = vperm.xlu0 %300, %v278
    %v302 = vpop.permute.xlu0 %301
    %v303 = vperm.slane %v257, 1
    %v304 = vlaneseq
    %v305 = vshrl.u32 %v304, 7
    %307 = vset.pattern.permute.xlu0 %v305
    %308 = vperm.xlu0 %307, %v303
    %v309 = vpop.permute.xlu0 %308
    %v310 = vlaneseq
    %v311 = vshrl.u32 %v310, 7
    %v312 = vadd.s32 %v311, 8
    %313 = vset.pattern.permute.xlu0 %v312
    %314 = vperm.xlu0 %313, %v303
    %v315 = vpop.permute.xlu0 %314
    %v316 = vlaneseq
    %v317 = vshrl.u32 %v316, 7
    %v318 = vadd.s32 %v317, 16
    %319 = vset.pattern.permute.xlu0 %v318
    %320 = vperm.xlu0 %319, %v303
    %v321 = vpop.permute.xlu0 %320
    %v322 = vlaneseq
    %v323 = vshrl.u32 %v322, 7
    %v324 = vadd.s32 %v323, 24
    %325 = vset.pattern.permute.xlu0 %v324
    %326 = vperm.xlu0 %325, %v303
    %v327 = vpop.permute.xlu0 %326
    %v328 = vperm.slane %v277, 0
    %v329 = vlaneseq
    %v330 = vshrl.u32 %v329, 7
    %332 = vset.pattern.permute.xlu0 %v330
    %333 = vperm.xlu0 %332, %v328
    %v334 = vpop.permute.xlu0 %333
    %v335 = vlaneseq
    %v336 = vshrl.u32 %v335, 7
    %v337 = vadd.s32 %v336, 8
    %338 = vset.pattern.permute.xlu0 %v337
    %339 = vperm.xlu0 %338, %v328
    %v340 = vpop.permute.xlu0 %339
    %v341 = vlaneseq
    %v342 = vshrl.u32 %v341, 7
    %v343 = vadd.s32 %v342, 16
    %344 = vset.pattern.permute.xlu0 %v343
    %345 = vperm.xlu0 %344, %v328
    %v346 = vpop.permute.xlu0 %345
    %v347 = vlaneseq
    %v348 = vshrl.u32 %v347, 7
    %v349 = vadd.s32 %v348, 24
    %350 = vset.pattern.permute.xlu0 %v349
    %351 = vperm.xlu0 %350, %v328
    %v352 = vpop.permute.xlu0 %351
    %v353 = vperm.slane %v277, 1
    %v354 = vlaneseq
    %v355 = vshrl.u32 %v354, 7
    %357 = vset.pattern.permute.xlu0 %v355
    %358 = vperm.xlu0 %357, %v353
    %v359 = vpop.permute.xlu0 %358
    %v360 = vlaneseq
    %v361 = vshrl.u32 %v360, 7
    %v362 = vadd.s32 %v361, 8
    %363 = vset.pattern.permute.xlu0 %v362
    %364 = vperm.xlu0 %363, %v353
    %v365 = vpop.permute.xlu0 %364
    %v366 = vlaneseq
    %v367 = vshrl.u32 %v366, 7
    %v368 = vadd.s32 %v367, 16
    %369 = vset.pattern.permute.xlu0 %v368
    %370 = vperm.xlu0 %369, %v353
    %v371 = vpop.permute.xlu0 %370
    %v372 = vlaneseq
    %v373 = vshrl.u32 %v372, 7
    %v374 = vadd.s32 %v373, 24
    %375 = vset.pattern.permute.xlu0 %v374
    %376 = vperm.xlu0 %375, %v353
    %v377 = vpop.permute.xlu0 %376
    %v378 = vmul.f32 %v31, %v284
    %v379 = vmul.f32 %v32, %v284
    %v380 = vmul.f32 %v33, %v290
    %v381 = vmul.f32 %v34, %v290
    %v382 = vmul.f32 %v35, %v296
    %v383 = vmul.f32 %v36, %v296
    %v384 = vmul.f32 %v37, %v302
    %v385 = vmul.f32 %v38, %v302
    %v386 = vmul.f32 %v39, %v309
    %v387 = vmul.f32 %v40, %v309
    %v388 = vmul.f32 %v41, %v315
    %v389 = vmul.f32 %v42, %v315
    %v390 = vmul.f32 %v43, %v321
    %v391 = vmul.f32 %v44, %v321
    %v392 = vmul.f32 %v45, %v327
    %v393 = vmul.f32 %v46, %v327
    %394 = vst [vmem:[#allocation5] sm:$0xff] %v378
    %395 = vst [vmem:[#allocation5 + $0x8] sm:$0xff] %v379
    %396 = vst [vmem:[#allocation5 + $0x10] sm:$0xff] %v380
    %397 = vst [vmem:[#allocation5 + $0x18] sm:$0xff] %v381
    %398 = vst [vmem:[#allocation5 + $0x20] sm:$0xff] %v382
    %399 = vst [vmem:[#allocation5 + $0x28] sm:$0xff] %v383
    %400 = vst [vmem:[#allocation5 + $0x30] sm:$0xff] %v384
    %401 = vst [vmem:[#allocation5 + $0x38] sm:$0xff] %v385
    %402 = vst [vmem:[#allocation5 + $0x80] sm:$0xff] %v386
    %403 = vst [vmem:[#allocation5 + $0x88] sm:$0xff] %v387
    %404 = vst [vmem:[#allocation5 + $0x90] sm:$0xff] %v388
    %405 = vst [vmem:[#allocation5 + $0x98] sm:$0xff] %v389
    %406 = vst [vmem:[#allocation5 + $0xa0] sm:$0xff] %v390
    %407 = vst [vmem:[#allocation5 + $0xa8] sm:$0xff] %v391
    %408 = vst [vmem:[#allocation5 + $0xb0] sm:$0xff] %v392
    %409 = vst [vmem:[#allocation5 + $0xb8] sm:$0xff] %v393
    %v410 = vmul.f32 %v31, %v334
    %v411 = vmul.f32 %v32, %v334
    %v412 = vmul.f32 %v33, %v340
    %v413 = vmul.f32 %v34, %v340
    %v414 = vmul.f32 %v35, %v346
    %v415 = vmul.f32 %v36, %v346
    %v416 = vmul.f32 %v37, %v352
    %v417 = vmul.f32 %v38, %v352
    %v418 = vmul.f32 %v39, %v359
    %v419 = vmul.f32 %v40, %v359
    %v420 = vmul.f32 %v41, %v365
    %v421 = vmul.f32 %v42, %v365
    %v422 = vmul.f32 %v43, %v371
    %v423 = vmul.f32 %v44, %v371
    %v424 = vmul.f32 %v45, %v377
    %v425 = vmul.f32 %v46, %v377
    %s426 = scalar_lea.vmem [#allocation5], 64
    %427 = vst [vmem:[%s426] sm:$0xff] %v410
    %428 = vst [vmem:[%s426 + $0x8] sm:$0xff] %v411
    %429 = vst [vmem:[%s426 + $0x10] sm:$0xff] %v412
    %430 = vst [vmem:[%s426 + $0x18] sm:$0xff] %v413
    %431 = vst [vmem:[%s426 + $0x20] sm:$0xff] %v414
    %432 = vst [vmem:[%s426 + $0x28] sm:$0xff] %v415
    %433 = vst [vmem:[%s426 + $0x30] sm:$0xff] %v416
    %434 = vst [vmem:[%s426 + $0x38] sm:$0xff] %v417
    %435 = vst [vmem:[%s426 + $0x80] sm:$0xff] %v418
    %436 = vst [vmem:[%s426 + $0x88] sm:$0xff] %v419
    %437 = vst [vmem:[%s426 + $0x90] sm:$0xff] %v420
    %438 = vst [vmem:[%s426 + $0x98] sm:$0xff] %v421
    %439 = vst [vmem:[%s426 + $0xa0] sm:$0xff] %v422
    %440 = vst [vmem:[%s426 + $0xa8] sm:$0xff] %v423
    %441 = vst [vmem:[%s426 + $0xb0] sm:$0xff] %v424
    %442 = vst [vmem:[%s426 + $0xb8] sm:$0xff] %v425
    // Predicated region
    $region18: #{tpu_custom_call.1} parent=1 // pred_check
      _
    $region19: #{tpu_custom_call.1} parent=1 // pred_check_branch
      %444 = sbr.rel (0) target = $region21
    $region20: #{tpu_custom_call.1} parent=1 // pred_region
      %446 = vsyncadd [#allocation4], 0
      %s447 = sshll.u32 [#allocation5], 4
      %s448 = int_to_ptr.vmem [resolvable:$true] %s447
      %s449 = sshll.u32 %s3, 4
      %s450 = int_to_ptr.hbm [resolvable:$true] %s449
      %455 = dma.vmem_to_hbm [thread:$0]  %s448, 4096, %s450, [#allocation4], 256, 256, 16
    $region21: #{tpu_custom_call.1} parent=1 // pred_fallthru
      _
    // Predicated region
    $region22: #{tpu_custom_call.1} parent=1 // pred_check
      _
    $region23: #{tpu_custom_call.1} parent=1 // pred_check_branch
      %457 = sbr.rel (0) target = $region25
    $region24: #{tpu_custom_call.1} parent=1 // pred_region
      %459 = dma.done [#allocation4], 4096
    $region25: #{tpu_custom_call.1} parent=1 // pred_fallthru
      _
    %460 = vsyncpa [#allocation3], 1
    %461 = vsyncpa [#allocation4], 1

</llo_original>
